<compile_context>
chip_gen: v7x
topology: tpu7x:2x2x1
jax: 0.10.0
libtpu: 0.0.40
codegen_flags: <defaults>
</compile_context>

<pallas_src>
import jax
import jax.numpy as jnp
from jax.experimental import pallas as pl
from jax.experimental.pallas import tpu as pltpu


def _round_up(x: int, m: int) -> int:
    return (x + m - 1) // m * m


def _cdiv(a: int, b: int) -> int:
    return (a + b - 1) // b


def _vmem_capacity_bytes() -> int:
    """Physical VMEM per TensorCore; conservative fallback if the query fails."""
    try:
        info = pltpu.get_tpu_info()
        cap = getattr(info, "vmem_capacity_bytes", None)
        if cap:
            return int(cap)
    except Exception:
        pass
    return 64 * 1024 * 1024  # v7x per-TC capacity: safe lower bound everywhere


def _make_mlp_kernel(num_linear: int):
    """Fused MLP kernel for `num_linear` Linear layers."""

    def kernel(*refs):
        # refs = (x_ref, w1, b1, w2, b2, ..., wN, bN, out_ref)
        x_ref, out_ref = refs[0], refs[-1]
        params = refs[1:-1]

        h = x_ref[...]                               # (tile_b, d_in), bf16
        for li in range(num_linear):
            w = params[2 * li][...]                  # (d_in, d_out), bf16
            b = params[2 * li + 1][...]              # (1, d_out), f32
            # bf16 x bf16 -> f32 accumulate on the MXU.
            h = jnp.dot(h, w, preferred_element_type=jnp.float32) + b
            if li < num_linear - 1:
                h = h * jax.nn.sigmoid(h)            # SiLU, kept in f32
                # Dropout(p=0.0) -> identity (nothing to emit).
                h = h.astype(jnp.bfloat16)           # next MXU operand
        out_ref[...] = h.astype(out_ref.dtype)

    return kernel


def prepare_mlp_params(weights, biases):
    """One-time preprocessing: bf16 (d_in, d_out) weights, f32 (1, d_out) biases."""
    w_p = [jnp.asarray(w, jnp.bfloat16) for w in weights]
    b_p = [jnp.asarray(b, jnp.float32).reshape(1, -1) for b in biases]
    return w_p, b_p


def _pick_tile_b(B: int, dims, weight_bytes: int, vmem_limit: int) -> int:
    d_in, d_out = dims[0], dims[-1]
    # Per-row VMEM: double-buffered bf16 input tile + double-buffered f32 output tile.
    per_row = 2 * d_in * 2 + 2 * d_out * 4
    # Live f32/bf16 intermediates inside the kernel (peak over consecutive layers),
    # with a 1.5x fudge for compiler temporaries.
    peak = max(dims[i] + dims[i + 1] for i in range(len(dims) - 1))
    per_row += int(1.5 * 6 * peak)
    budget = int(0.70 * vmem_limit) - 2 * weight_bytes   # weights default double-buffered
    max_tile = max(8, min(4096, (budget // max(per_row, 1)) // 8 * 8))
    # >= 2 grid steps for larger batches so ("parallel",) can use both v7x TCs
    # (only ~0.35 us extra pipeline overhead on single-TC v5e/v6e).
    min_steps = 2 if B >= 64 else 1
    steps = max(min_steps, _cdiv(B, max_tile))
    cand = _round_up(_cdiv(B, steps), 8)
    # Block dims must be multiples of 8 OR equal the full array extent.
    return B if cand >= B else cand


def mlp_forward(x, weights_bf16, biases_f32):
    """Runs the fused MLP Pallas kernel.

    Args:
      x:            (B, d_input) array (any float dtype; cast to bf16 once here).
      weights_bf16: list of (d_in_i, d_out_i) bf16 arrays (transposed vs. torch).
      biases_f32:   list of (1, d_out_i) f32 arrays.
    Returns:
      (B, d_output) float32
    """
    assert len(weights_bf16) == len(biases_f32) and len(weights_bf16) >= 1
    num_linear = len(weights_bf16)
    B, d_input = x.shape
    assert weights_bf16[0].shape[0] == d_input
    dims = [d_input] + [w.shape[1] for w in weights_bf16]
    d_output = dims[-1]

    if x.dtype != jnp.bfloat16:
        x = x.astype(jnp.bfloat16)   # halve the dominant HBM input stream

    cap = _vmem_capacity_bytes()
    vmem_limit = int(max(32 * 1024 * 1024,
                         min(cap - 12 * 1024 * 1024, 100 * 1024 * 1024)))

    weight_bytes = (sum(w.size * 2 for w in weights_bf16)
                    + sum(b.size * 4 for b in biases_f32))
    tile_b = _pick_tile_b(B, dims, weight_bytes, vmem_limit)
    grid = (_cdiv(B, tile_b),)

    # x / out tile over the batch; weights & biases use full-array blocks with a
    # constant index_map, so they stay VMEM-resident across all grid steps.
    in_specs = [pl.BlockSpec((tile_b, d_input), lambda i: (i, 0))]
    operands = [x]
    for w, b in zip(weights_bf16, biases_f32):
        # TODO(synk): pipeline_mode=pl.Buffered(1) would single-buffer these
        # constant blocks; left at the default since they are ~100 KB here.
        in_specs.append(pl.BlockSpec(w.shape, lambda i: (0, 0)))
        in_specs.append(pl.BlockSpec(b.shape, lambda i: (0, 0)))
        operands.append(w)
        operands.append(b)

    out_spec = pl.BlockSpec((tile_b, d_output), lambda i: (i, 0))

    fn = pl.pallas_call(
        _make_mlp_kernel(num_linear),
        out_shape=jax.ShapeDtypeStruct((B, d_output), jnp.float32),
        grid_spec=pl.GridSpec(grid=grid, in_specs=in_specs, out_specs=out_spec),
        compiler_params=pltpu.CompilerParams(
            dimension_semantics=("parallel",),   # megacore sharding on v7x
            vmem_limit_bytes=vmem_limit,
        ),
    )
    return fn(*operands)


def init_mlp_params(key, d_input, hidden_dims, d_output):
    """Deterministic synthetic init mirroring torch.nn.Linear (transposed)."""
    dims = [d_input] + list(hidden_dims) + [d_output]
    weights, biases = [], []
    for i in range(len(dims) - 1):
        d_in, d_out = dims[i], dims[i + 1]
        key, kw, kb = jax.random.split(key, 3)
        bound = 1.0 / float(d_in) ** 0.5
        weights.append(jax.random.uniform(kw, (d_in, d_out), jnp.float32, -bound, bound))
        biases.append(jax.random.uniform(kb, (1, d_out), jnp.float32, -bound, bound))
    return weights, biases


def mlp_reference(x, weights, biases):
    """Plain-JAX reference using the same bf16-operand / f32-accum recipe."""
    h = x
    n = len(weights)
    for i, (w, b) in enumerate(zip(weights, biases)):
        h = jnp.dot(h.astype(jnp.bfloat16), jnp.asarray(w, jnp.bfloat16),
                    preferred_element_type=jnp.float32)
        h = h + jnp.asarray(b, jnp.float32).reshape(1, -1)
        if i < n - 1:
            h = h * jax.nn.sigmoid(h)
    return h


if __name__ == "__main__":
    # MLP(d_input=32, hidden_dims=[64, 64], d_output=16), SiLU, dropout=0.0.
    d_input, hidden_dims, d_output = 32, [64, 64], 16

    key = jax.random.PRNGKey(0)
    key, kp = jax.random.split(key)
    weights, biases = init_mlp_params(kp, d_input, hidden_dims, d_output)
    w_prep, b_prep = prepare_mlp_params(weights, biases)   # one-time bf16/f32 prep

    # Test 1: small batch, single grid step, no padding anywhere.
    key, kx1 = jax.random.split(key)
    x1 = jax.random.normal(kx1, (8, d_input), jnp.float32)
    out1 = jax.block_until_ready(mlp_forward(x1, w_prep, b_prep))
    ref1 = mlp_reference(x1, weights, biases)
    assert out1.shape == (8, d_output)
    assert jnp.allclose(out1, ref1, atol=1e-3, rtol=1e-3), "mismatch (test 1)"

    # Test 2: multi-step grid with a ragged last batch block (no host padding,
    # OOB rows produced by the kernel are discarded by Pallas on writeback).
    key, kx2 = jax.random.split(key)
    x2 = jax.random.normal(kx2, (200, d_input), jnp.float32)
    out2 = jax.block_until_ready(mlp_forward(x2, w_prep, b_prep))
    ref2 = mlp_reference(x2, weights, biases)
    assert out2.shape == (200, d_output)
    assert jnp.allclose(out2, ref2, atol=1e-3, rtol=1e-3), "mismatch (test 2)"

    print("KERNEL_OK")
</pallas_src>

<mosaic_0001>
module attributes {stable_mosaic.version = 11 : i64} {
  func.func @kernel(%arg0: i32, %arg1: memref<8x32xbf16, #tpu.memory_space<vmem>>, %arg2: memref<32x64xbf16, #tpu.memory_space<vmem>>, %arg3: memref<1x64xf32, #tpu.memory_space<vmem>>, %arg4: memref<64x64xbf16, #tpu.memory_space<vmem>>, %arg5: memref<1x64xf32, #tpu.memory_space<vmem>>, %arg6: memref<64x16xbf16, #tpu.memory_space<vmem>>, %arg7: memref<1x16xf32, #tpu.memory_space<vmem>>, %arg8: memref<8x16xf32, #tpu.memory_space<vmem>>) attributes {dimension_semantics = [#tpu.dimension_semantics<parallel>], iteration_bounds = array<i64: 1>, scalar_prefetch = 0 : i64, scratch_operands = 0 : i64, tpu.core_type = #tpu.core_type<tc>, window_params = [{transform_indices = @transform_0, window_bounds = array<i64: 8, 32>}, {pipeline_mode = #tpu.pipeline_mode<synchronous>, transform_indices = @transform_1, window_bounds = array<i64: 32, 64>}, {pipeline_mode = #tpu.pipeline_mode<synchronous>, transform_indices = @transform_2, window_bounds = array<i64: 1, 64>}, {pipeline_mode = #tpu.pipeline_mode<synchronous>, transform_indices = @transform_3, window_bounds = array<i64: 64, 64>}, {pipeline_mode = #tpu.pipeline_mode<synchronous>, transform_indices = @transform_4, window_bounds = array<i64: 1, 64>}, {pipeline_mode = #tpu.pipeline_mode<synchronous>, transform_indices = @transform_5, window_bounds = array<i64: 64, 16>}, {pipeline_mode = #tpu.pipeline_mode<synchronous>, transform_indices = @transform_6, window_bounds = array<i64: 1, 16>}, {transform_indices = @transform_7, window_bounds = array<i64: 8, 16>}]} {
    %c0 = arith.constant 0 : index
    %c0_0 = arith.constant 0 : index
    %0 = vector.load %arg1[%c0, %c0_0] : memref<8x32xbf16, #tpu.memory_space<vmem>>, vector<8x32xbf16>
    %c0_1 = arith.constant 0 : index
    %c0_2 = arith.constant 0 : index
    %1 = vector.load %arg2[%c0_1, %c0_2] : memref<32x64xbf16, #tpu.memory_space<vmem>>, vector<32x64xbf16>
    %c0_3 = arith.constant 0 : index
    %c0_4 = arith.constant 0 : index
    %2 = vector.load %arg3[%c0_3, %c0_4] : memref<1x64xf32, #tpu.memory_space<vmem>>, vector<1x64xf32>
    %cst = arith.constant dense<0.000000e+00> : vector<8x64xf32>
    %3 = tpu.matmul %0, %1, %cst {dimension_numbers = #tpu.dot_dimension_numbers<[1], [0], [0], [1], [0, 0, 1, 1], [], []>} : vector<8x32xbf16>, vector<32x64xbf16>, vector<8x64xf32> -> vector<8x64xf32>
    %4 = vector.broadcast %2 : vector<1x64xf32> to vector<8x64xf32>
    %5 = arith.addf %3, %4 : vector<8x64xf32>
    %6 = arith.negf %5 : vector<8x64xf32>
    %7 = math.exp %6 : vector<8x64xf32>
    %cst_5 = arith.constant 1.000000e+00 : f32
    %8 = vector.broadcast %cst_5 : f32 to vector<8x64xf32>
    %9 = arith.addf %8, %7 : vector<8x64xf32>
    %10 = arith.divf %8, %9 : vector<8x64xf32>
    %11 = arith.mulf %5, %10 : vector<8x64xf32>
    %12 = arith.truncf %11 : vector<8x64xf32> to vector<8x64xbf16>
    %c0_6 = arith.constant 0 : index
    %c0_7 = arith.constant 0 : index
    %13 = vector.load %arg4[%c0_6, %c0_7] : memref<64x64xbf16, #tpu.memory_space<vmem>>, vector<64x64xbf16>
    %c0_8 = arith.constant 0 : index
    %c0_9 = arith.constant 0 : index
    %14 = vector.load %arg5[%c0_8, %c0_9] : memref<1x64xf32, #tpu.memory_space<vmem>>, vector<1x64xf32>
    %cst_10 = arith.constant dense<0.000000e+00> : vector<8x64xf32>
    %15 = tpu.matmul %12, %13, %cst_10 {dimension_numbers = #tpu.dot_dimension_numbers<[1], [0], [0], [1], [0, 0, 1, 1], [], []>} : vector<8x64xbf16>, vector<64x64xbf16>, vector<8x64xf32> -> vector<8x64xf32>
    %16 = vector.broadcast %14 : vector<1x64xf32> to vector<8x64xf32>
    %17 = arith.addf %15, %16 : vector<8x64xf32>
    %18 = arith.negf %17 : vector<8x64xf32>
    %19 = math.exp %18 : vector<8x64xf32>
    %cst_11 = arith.constant 1.000000e+00 : f32
    %20 = vector.broadcast %cst_11 : f32 to vector<8x64xf32>
    %21 = arith.addf %20, %19 : vector<8x64xf32>
    %22 = arith.divf %20, %21 : vector<8x64xf32>
    %23 = arith.mulf %17, %22 : vector<8x64xf32>
    %24 = arith.truncf %23 : vector<8x64xf32> to vector<8x64xbf16>
    %c0_12 = arith.constant 0 : index
    %c0_13 = arith.constant 0 : index
    %25 = vector.load %arg6[%c0_12, %c0_13] : memref<64x16xbf16, #tpu.memory_space<vmem>>, vector<64x16xbf16>
    %c0_14 = arith.constant 0 : index
    %c0_15 = arith.constant 0 : index
    %26 = vector.load %arg7[%c0_14, %c0_15] : memref<1x16xf32, #tpu.memory_space<vmem>>, vector<1x16xf32>
    %cst_16 = arith.constant dense<0.000000e+00> : vector<8x16xf32>
    %27 = tpu.matmul %24, %25, %cst_16 {dimension_numbers = #tpu.dot_dimension_numbers<[1], [0], [0], [1], [0, 0, 1, 1], [], []>} : vector<8x64xbf16>, vector<64x16xbf16>, vector<8x16xf32> -> vector<8x16xf32>
    %28 = vector.broadcast %26 : vector<1x16xf32> to vector<8x16xf32>
    %29 = arith.addf %27, %28 : vector<8x16xf32>
    %c0_17 = arith.constant 0 : index
    %c0_18 = arith.constant 0 : index
    %30 = vector.load %arg8[%c0_17, %c0_18] : memref<8x16xf32, #tpu.memory_space<vmem>>, vector<8x16xf32>
    tpu.vector_store %arg8[%c0_17, %c0_18], %29 {strides = array<i32>} : memref<8x16xf32, #tpu.memory_space<vmem>>, vector<8x16xf32>,
    return
  }
  func.func @transform_0(%arg0: i32) -> (i32, i32) {
    %c0_i32 = arith.constant 0 : i32
    %c0_i32_0 = arith.constant 0 : i32
    return %arg0, %c0_i32 : i32, i32
  }
  func.func @transform_1(%arg0: i32) -> (i32, i32) {
    %c0_i32 = arith.constant 0 : i32
    %c0_i32_0 = arith.constant 0 : i32
    %c0_i32_1 = arith.constant 0 : i32
    return %c0_i32, %c0_i32_0 : i32, i32
  }
  func.func @transform_2(%arg0: i32) -> (i32, i32) {
    %c0_i32 = arith.constant 0 : i32
    %c0_i32_0 = arith.constant 0 : i32
    %c0_i32_1 = arith.constant 0 : i32
    return %c0_i32, %c0_i32_0 : i32, i32
  }
  func.func @transform_3(%arg0: i32) -> (i32, i32) {
    %c0_i32 = arith.constant 0 : i32
    %c0_i32_0 = arith.constant 0 : i32
    %c0_i32_1 = arith.constant 0 : i32
    return %c0_i32, %c0_i32_0 : i32, i32
  }
  func.func @transform_4(%arg0: i32) -> (i32, i32) {
    %c0_i32 = arith.constant 0 : i32
    %c0_i32_0 = arith.constant 0 : i32
    %c0_i32_1 = arith.constant 0 : i32
    return %c0_i32, %c0_i32_0 : i32, i32
  }
  func.func @transform_5(%arg0: i32) -> (i32, i32) {
    %c0_i32 = arith.constant 0 : i32
    %c0_i32_0 = arith.constant 0 : i32
    %c0_i32_1 = arith.constant 0 : i32
    return %c0_i32, %c0_i32_0 : i32, i32
  }
  func.func @transform_6(%arg0: i32) -> (i32, i32) {
    %c0_i32 = arith.constant 0 : i32
    %c0_i32_0 = arith.constant 0 : i32
    %c0_i32_1 = arith.constant 0 : i32
    return %c0_i32, %c0_i32_0 : i32, i32
  }
  func.func @transform_7(%arg0: i32) -> (i32, i32) {
    %c0_i32 = arith.constant 0 : i32
    %c0_i32_0 = arith.constant 0 : i32
    return %arg0, %c0_i32 : i32, i32
  }
}

</mosaic_0001>

<llo_original>
// kernel: tpu_custom_call.1
$region0: #{tpu_custom_call.1}
  #allocation0 [shape = 'u32[]', space=smem, size = 0x4, offset = 0x4, fixed_abs, tag = 'smem constant byte address 0x4 - core index']
  #allocation1 [shape = 'u32[144,128]{1,0:T(1,128)}', space=vmem, size = 0x12000, scoped, tag = 'internal scratch']
  %s0 = inlined_call_operand.hbm [shape: bf16[8,32], index: 0, kind: input, shape index: {}]
  %s1 = inlined_call_operand.vmem [shape: bf16[32,64], index: 1, kind: input, shape index: {}]
  %s2 = inlined_call_operand.vmem [shape: f32[1,64], index: 2, kind: input, shape index: {}]
  %s3 = inlined_call_operand.vmem [shape: bf16[64,64], index: 3, kind: input, shape index: {}]
  %s4 = inlined_call_operand.vmem [shape: f32[1,64], index: 4, kind: input, shape index: {}]
  %s5 = inlined_call_operand.vmem [shape: bf16[64,16], index: 5, kind: input, shape index: {}]
  %s6 = inlined_call_operand.vmem [shape: f32[1,16], index: 6, kind: input, shape index: {}]
  %s7 = inlined_call_operand.hbm [shape: f32[8,16], index: 7, kind: output, shape index: {}]
  %s8 = sld [smem:[#allocation0]]
  $region42: #{tpu_custom_call.1} parent=0
    _
  %s10 = ssub.s32 1, %s8
  %s11 = scalar_select 0, %s10, %s8
  $region1: #{tpu_custom_call.1} parent=0
    #allocation2 [shape = 'u8[2048]{0}', space=vmem, size = 0x800, scoped, tag = 'input window, operand 0, single buffered']
    #allocation3 [shape = 's32[1]{0}', space=sflag, size = 0x4, scoped, tag = 'scoped memory for tpu_custom_call.1']
    #allocation4 [shape = 's32[1]{0}', space=sflag, size = 0x4, scoped, tag = 'scoped memory for tpu_custom_call.1']
    #allocation5 [shape = 'u8[4096]{0}', space=vmem, size = 0x1000, scoped, tag = 'output window, operand 0, single buffered']
    %12 = vsyncpa [#allocation3], 0
    %13 = vsyncpa [#allocation4], 0
    // Predicated region
    $region2: #{tpu_custom_call.1} parent=1 // pred_check
      _
    $region3: #{tpu_custom_call.1} parent=1 // pred_check_branch
      %15 = sbr.rel (0) target = $region5
    $region4: #{tpu_custom_call.1} parent=1 // pred_region
      %s17 = ssub.s32 64, 64
      %18 = vsyncadd [#allocation3], %s17
      %s20 = sshll.u32 [#allocation2], 4
      %s21 = int_to_ptr.vmem [resolvable:$true] %s20
      %23 = dma.hbm_to_vmem [thread:$0]  %s0, 64, %s21, [#allocation3]
    $region5: #{tpu_custom_call.1} parent=1 // pred_fallthru
      _
    // Predicated region
    $region6: #{tpu_custom_call.1} parent=1 // pred_check
      _
    $region7: #{tpu_custom_call.1} parent=1 // pred_check_branch
      %25 = sbr.rel (0) target = $region9
    $region8: #{tpu_custom_call.1} parent=1 // pred_region
      _
    $region9: #{tpu_custom_call.1} parent=1 // pred_fallthru
      _
    // Predicated region
    $region10: #{tpu_custom_call.1} parent=1 // pred_check
      _
    $region11: #{tpu_custom_call.1} parent=1 // pred_check_branch
      %27 = sbr.rel (0) target = $region13
    $region12: #{tpu_custom_call.1} parent=1 // pred_region
      _
    $region13: #{tpu_custom_call.1} parent=1 // pred_fallthru
      _
    // Predicated region
    $region14: #{tpu_custom_call.1} parent=1 // pred_check
      _
    $region15: #{tpu_custom_call.1} parent=1 // pred_check_branch
      %29 = sbr.rel (0) target = $region17
    $region16: #{tpu_custom_call.1} parent=1 // pred_region
      _
    $region17: #{tpu_custom_call.1} parent=1 // pred_fallthru
      _
    // Predicated region
    $region18: #{tpu_custom_call.1} parent=1 // pred_check
      _
    $region19: #{tpu_custom_call.1} parent=1 // pred_check_branch
      %31 = sbr.rel (0) target = $region21
    $region20: #{tpu_custom_call.1} parent=1 // pred_region
      _
    $region21: #{tpu_custom_call.1} parent=1 // pred_fallthru
      _
    // Predicated region
    $region22: #{tpu_custom_call.1} parent=1 // pred_check
      _
    $region23: #{tpu_custom_call.1} parent=1 // pred_check_branch
      %33 = sbr.rel (0) target = $region25
    $region24: #{tpu_custom_call.1} parent=1 // pred_region
      _
    $region25: #{tpu_custom_call.1} parent=1 // pred_fallthru
      _
    // Predicated region
    $region26: #{tpu_custom_call.1} parent=1 // pred_check
      _
    $region27: #{tpu_custom_call.1} parent=1 // pred_check_branch
      %35 = sbr.rel (0) target = $region29
    $region28: #{tpu_custom_call.1} parent=1 // pred_region
      _
    $region29: #{tpu_custom_call.1} parent=1 // pred_fallthru
      _
    // Predicated region
    $region30: #{tpu_custom_call.1} parent=1 // pred_check
      _
    $region31: #{tpu_custom_call.1} parent=1 // pred_check_branch
      %37 = sbr.rel (0) target = $region33
    $region32: #{tpu_custom_call.1} parent=1 // pred_region
      %38 = dma.done [#allocation3], 64
    $region33: #{tpu_custom_call.1} parent=1 // pred_fallthru
      _
    %v40 = vld [vmem:[#allocation2] sm:$0xf]
    %v41 = vld [vmem:[%s1] sm:$0xf]
    %v42 = vld [vmem:[%s1 + $0x4] sm:$0xf]
    %v43 = vld [vmem:[%s1 + $0x8] sm:$0xf]
    %v44 = vld [vmem:[%s1 + $0xc] sm:$0xf]
    %v45 = vld [vmem:[%s2] sm:$0x1]
    %v47 = vlaneseq
    %v48 = vshrl.u32 %v47, 7
    %v49 = vsub.s32 0, %v48
    %v50 = vrot.slane %v45, %v49
    %v56 = vunpack.c.l.b16 %v41
    %v57 = vunpack.c.l.b16 %v42
    %v58 = vunpack.c.l.b16 %v43
    %v59 = vunpack.c.l.b16 %v44
    %v60 = vpack.c.b16 %v57, %v56
    %v61 = vpack.c.b16 %v59, %v58
    %vm64 = vcmask 261120
    %v66 = vsel %vm64, %v40, 0
    %68 = vmatprep.subr.bf16.mxu0 0
    %69 = vmatpush1.bf16.msra.mxu0 %v60
    %70 = vmatprep.subr.bf16.mxu0 0
    %71 = vmatpush1.bf16.msra.mxu0 %v61
    %72 = vmatprep.subr.bf16.mxu0 0
    %73 = vmatpush1.bf16.msra.mxu0 0
    %74 = vmatprep.subr.bf16.mxu0 0
    %75 = vmatpush1.bf16.msra.mxu0 0
    %76 = vmatprep.subr.bf16.mxu0 0
    %77 = vmatpush1.bf16.msra.mxu0 0
    %78 = vmatprep.subr.bf16.mxu0 0
    %79 = vmatpush1.bf16.msra.mxu0 0
    %80 = vmatprep.subr.bf16.mxu0 0
    %81 = vmatpush1.bf16.msra.mxu0 0
    %82 = vmatprep.subr.bf16.mxu0 0
    %83 = vmatpush1.bf16.msra.mxu0 0
    %84 = vmatprep.subr.bf16.mxu0 0
    %85 = vmatpush1.bf16.msra.mxu0 0
    %86 = vmatprep.subr.bf16.mxu0 0
    %87 = vmatpush1.bf16.msra.mxu0 0
    %88 = vmatprep.subr.bf16.mxu0 0
    %89 = vmatpush1.bf16.msra.mxu0 0
    %90 = vmatprep.subr.bf16.mxu0 0
    %91 = vmatpush1.bf16.msra.mxu0 0
    %92 = vmatprep.subr.bf16.mxu0 0
    %93 = vmatpush1.bf16.msra.mxu0 0
    %94 = vmatprep.subr.bf16.mxu0 0
    %95 = vmatpush1.bf16.msra.mxu0 0
    %96 = vmatprep.subr.bf16.mxu0 0
    %97 = vmatpush1.bf16.msra.mxu0 0
    %98 = vmatprep.subr.bf16.mxu0 0
    %99 = vmatpush1.bf16.msra.mxu0 0
    %100 = vmatprep.mubr.bf16.mxu0 0
    %101 = vmatmul.mubr.bf16.gmra.mrb[0].mxu0 %v66
    %v102 = vpop.f32.mrb[0].mxu0
    %v103 = vadd.f32 %v50, %v102
    %v104 = vpop.f32.mrb[0].mxu0
    %v105 = vpop.f32.mrb[0].mxu0
    %v106 = vpop.f32.mrb[0].mxu0
    %107 = vdwg.mxu0
    %v108 = vxor.u32 %v103, 2147483648
    %v109 = vmul.f32 %v108, 1.442695
    %v110 = vpow.pop %v109
    %v111 = vadd.f32 %v110, 1.0
    %v112 = vrcp.pop %v111
    %v113 = vmul.f32 1.0, %v112
    %v114 = vmul.f32 %v103, %v113
    %v115 = vpack.c.bf16 %v114, %v114
    %v116 = vld [vmem:[%s3] sm:$0xf]
    %v117 = vld [vmem:[%s3 + $0x4] sm:$0xf]
    %v118 = vld [vmem:[%s3 + $0x8] sm:$0xf]
    %v119 = vld [vmem:[%s3 + $0xc] sm:$0xf]
    %v120 = vld [vmem:[%s3 + $0x10] sm:$0xf]
    %v121 = vld [vmem:[%s3 + $0x14] sm:$0xf]
    %v122 = vld [vmem:[%s3 + $0x18] sm:$0xf]
    %v123 = vld [vmem:[%s3 + $0x1c] sm:$0xf]
    %v124 = vld [vmem:[%s4] sm:$0x1]
    %v126 = vlaneseq
    %v127 = vshrl.u32 %v126, 7
    %v128 = vsub.s32 0, %v127
    %v129 = vrot.slane %v124, %v128
    %v139 = vunpack.c.l.b16 %v116
    %v140 = vunpack.c.l.b16 %v117
    %v141 = vunpack.c.l.b16 %v118
    %v142 = vunpack.c.l.b16 %v119
    %v143 = vunpack.c.l.b16 %v120
    %v144 = vunpack.c.l.b16 %v121
    %v145 = vunpack.c.l.b16 %v122
    %v146 = vunpack.c.l.b16 %v123
    %v147 = vpack.c.b16 %v140, %v139
    %v148 = vpack.c.b16 %v142, %v141
    %v149 = vpack.c.b16 %v144, %v143
    %v150 = vpack.c.b16 %v146, %v145
    %vm155 = vcmask 523264
    %v157 = vsel %vm155, %v115, 0
    %159 = vmatprep.subr.bf16.mxu0 0
    %160 = vmatpush1.bf16.msra.mxu0 %v147
    %161 = vmatprep.subr.bf16.mxu0 0
    %162 = vmatpush1.bf16.msra.mxu0 %v148
    %163 = vmatprep.subr.bf16.mxu0 0
    %164 = vmatpush1.bf16.msra.mxu0 %v149
    %165 = vmatprep.subr.bf16.mxu0 0
    %166 = vmatpush1.bf16.msra.mxu0 %v150
    %167 = vmatprep.subr.bf16.mxu0 0
    %168 = vmatpush1.bf16.msra.mxu0 0
    %169 = vmatprep.subr.bf16.mxu0 0
    %170 = vmatpush1.bf16.msra.mxu0 0
    %171 = vmatprep.subr.bf16.mxu0 0
    %172 = vmatpush1.bf16.msra.mxu0 0
    %173 = vmatprep.subr.bf16.mxu0 0
    %174 = vmatpush1.bf16.msra.mxu0 0
    %175 = vmatprep.subr.bf16.mxu0 0
    %176 = vmatpush1.bf16.msra.mxu0 0
    %177 = vmatprep.subr.bf16.mxu0 0
    %178 = vmatpush1.bf16.msra.mxu0 0
    %179 = vmatprep.subr.bf16.mxu0 0
    %180 = vmatpush1.bf16.msra.mxu0 0
    %181 = vmatprep.subr.bf16.mxu0 0
    %182 = vmatpush1.bf16.msra.mxu0 0
    %183 = vmatprep.subr.bf16.mxu0 0
    %184 = vmatpush1.bf16.msra.mxu0 0
    %185 = vmatprep.subr.bf16.mxu0 0
    %186 = vmatpush1.bf16.msra.mxu0 0
    %187 = vmatprep.subr.bf16.mxu0 0
    %188 = vmatpush1.bf16.msra.mxu0 0
    %189 = vmatprep.subr.bf16.mxu0 0
    %190 = vmatpush1.bf16.msra.mxu0 0
    %191 = vmatprep.mubr.bf16.mxu0 0
    %192 = vmatmul.mubr.bf16.gmra.mrb[0].mxu0 %v157
    %v193 = vpop.f32.mrb[0].mxu0
    %v194 = vadd.f32 %v129, %v193
    %v195 = vpop.f32.mrb[0].mxu0
    %v196 = vpop.f32.mrb[0].mxu0
    %v197 = vpop.f32.mrb[0].mxu0
    %198 = vdwg.mxu0
    %v199 = vxor.u32 %v194, 2147483648
    %v200 = vmul.f32 %v199, 1.442695
    %v201 = vpow.pop %v200
    %v202 = vadd.f32 %v201, 1.0
    %v203 = vrcp.pop %v202
    %v204 = vmul.f32 1.0, %v203
    %v205 = vmul.f32 %v194, %v204
    %v206 = vpack.c.bf16 %v205, %v205
    %v207 = vld [vmem:[%s5] sm:$0xf]
    %v208 = vld [vmem:[%s5 + $0x4] sm:$0xf]
    %v209 = vld [vmem:[%s5 + $0x8] sm:$0xf]
    %v210 = vld [vmem:[%s5 + $0xc] sm:$0xf]
    %v211 = vld [vmem:[%s5 + $0x10] sm:$0xf]
    %v212 = vld [vmem:[%s5 + $0x14] sm:$0xf]
    %v213 = vld [vmem:[%s5 + $0x18] sm:$0xf]
    %v214 = vld [vmem:[%s5 + $0x1c] sm:$0xf]
    %v215 = vld [vmem:[%s6] sm:$0x1]
    %v217 = vlaneseq
    %v218 = vshrl.u32 %v217, 7
    %v219 = vsub.s32 0, %v218
    %v220 = vrot.slane %v215, %v219
    %v230 = vunpack.c.l.b16 %v207
    %v231 = vunpack.c.l.b16 %v208
    %v232 = vunpack.c.l.b16 %v209
    %v233 = vunpack.c.l.b16 %v210
    %v234 = vunpack.c.l.b16 %v211
    %v235 = vunpack.c.l.b16 %v212
    %v236 = vunpack.c.l.b16 %v213
    %v237 = vunpack.c.l.b16 %v214
    %v238 = vpack.c.b16 %v231, %v230
    %v239 = vpack.c.b16 %v233, %v232
    %v240 = vpack.c.b16 %v235, %v234
    %v241 = vpack.c.b16 %v237, %v236
    %v247 = vsel %vm155, %v206, 0
    %249 = vmatprep.subr.bf16.mxu0 0
    %250 = vmatpush1.bf16.msra.mxu0 %v238
    %251 = vmatprep.subr.bf16.mxu0 0
    %252 = vmatpush1.bf16.msra.mxu0 %v239
    %253 = vmatprep.subr.bf16.mxu0 0
    %254 = vmatpush1.bf16.msra.mxu0 %v240
    %255 = vmatprep.subr.bf16.mxu0 0
    %256 = vmatpush1.bf16.msra.mxu0 %v241
    %257 = vmatprep.subr.bf16.mxu0 0
    %258 = vmatpush1.bf16.msra.mxu0 0
    %259 = vmatprep.subr.bf16.mxu0 0
    %260 = vmatpush1.bf16.msra.mxu0 0
    %261 = vmatprep.subr.bf16.mxu0 0
    %262 = vmatpush1.bf16.msra.mxu0 0
    %263 = vmatprep.subr.bf16.mxu0 0
    %264 = vmatpush1.bf16.msra.mxu0 0
    %265 = vmatprep.subr.bf16.mxu0 0
    %266 = vmatpush1.bf16.msra.mxu0 0
    %267 = vmatprep.subr.bf16.mxu0 0
    %268 = vmatpush1.bf16.msra.mxu0 0
    %269 = vmatprep.subr.bf16.mxu0 0
    %270 = vmatpush1.bf16.msra.mxu0 0
    %271 = vmatprep.subr.bf16.mxu0 0
    %272 = vmatpush1.bf16.msra.mxu0 0
    %273 = vmatprep.subr.bf16.mxu0 0
    %274 = vmatpush1.bf16.msra.mxu0 0
    %275 = vmatprep.subr.bf16.mxu0 0
    %276 = vmatpush1.bf16.msra.mxu0 0
    %277 = vmatprep.subr.bf16.mxu0 0
    %278 = vmatpush1.bf16.msra.mxu0 0
    %279 = vmatprep.subr.bf16.mxu0 0
    %280 = vmatpush1.bf16.msra.mxu0 0
    %281 = vmatprep.mubr.bf16.mxu0 0
    %282 = vmatmul.mubr.bf16.gmra.mrb[0].mxu0 %v247
    %v283 = vpop.f32.mrb[0].mxu0
    %v284 = vadd.f32 %v220, %v283
    %v285 = vpop.f32.mrb[0].mxu0
    %v286 = vpop.f32.mrb[0].mxu0
    %v287 = vpop.f32.mrb[0].mxu0
    %288 = vdwg.mxu0
    %vm289 = vcmask 130048
    %290 = vst.msk [vmem:[#allocation5] sm:$0xff] %vm289, %v284
    // Predicated region
    $region34: #{tpu_custom_call.1} parent=1 // pred_check
      _
    $region35: #{tpu_custom_call.1} parent=1 // pred_check_branch
      %292 = sbr.rel (0) target = $region37
    $region36: #{tpu_custom_call.1} parent=1 // pred_region
      %s294 = ssub.s32 128, 128
      %295 = vsyncadd [#allocation4], %s294
      %s297 = sshll.u32 [#allocation5], 4
      %s298 = int_to_ptr.vmem [resolvable:$true] %s297
      %300 = dma.vmem_to_hbm [thread:$0]  %s298, 128, %s7, [#allocation4]
    $region37: #{tpu_custom_call.1} parent=1 // pred_fallthru
      _
    // Predicated region
    $region38: #{tpu_custom_call.1} parent=1 // pred_check
      _
    $region39: #{tpu_custom_call.1} parent=1 // pred_check_branch
      %302 = sbr.rel (0) target = $region41
    $region40: #{tpu_custom_call.1} parent=1 // pred_region
      %303 = dma.done [#allocation4], 128
    $region41: #{tpu_custom_call.1} parent=1 // pred_fallthru
      _
    %304 = vsyncpa [#allocation3], 1
    %305 = vsyncpa [#allocation4], 1

</llo_original>
